<compile_context>
chip_gen: v5e
topology: v5e:2x2
jax: 0.10.0
libtpu: 0.0.40
codegen_flags: <defaults>
</compile_context>

<pallas_src>
import jax
import jax.numpy as jnp
from jax.experimental import pallas as pl
from jax.experimental.pallas import tpu as pltpu


def _round_up(x, m):
    return ((x + m - 1) // m) * m


def gate_kernel(x_ref, w12_ref, whad_ref, b_ref, out_ref):
    # x_ref   : (Hw+Hg, TB) feature-major activations, rows = [lstm ; gat]
    # w12_ref : (O, Hw+Hg)   = 0.5 * W1^T           (resident)
    # whad_ref: (O, Hw)      = 0.5 * W2[:Hw]^T      (resident)
    # b_ref   : (O, 1)       = 0.5 * (b1 + b2)      (resident)
    # out_ref : (O, TB)
    hw = whad_ref.shape[1]
    x = x_ref[...]

    lstm = x[:hw, :]               # (Hw, TB)  sublane-aligned static slice
    gat_head = x[hw:2 * hw, :]     # first Hw rows of gat
    hadamard = gat_head * lstm     # VPU elementwise, no lane movement

    logits = (
        jnp.dot(w12_ref[...], x, preferred_element_type=jnp.float32)
        + jnp.dot(whad_ref[...], hadamard, preferred_element_type=jnp.float32)
        + b_ref[...]
    )
    out_ref[...] = jax.nn.sigmoid(logits).astype(out_ref.dtype)


def prepare_gate_params(w1, b1, w2, b2, hidden_dim_wavelet):
    """One-time parameter preprocessing (do NOT call per forward pass).

    w1: (Hw+Hg, O), b1: (O,), w2: (Hg, O), b2: (O,)   [row-major: y = x @ W + b]
    Returns feature-major, pre-scaled params:
      w12_t : (O, Hw+Hg) = 0.5 * W1^T
      whad_t: (O, Hw)    = 0.5 * W2[:Hw]^T
      b_fm  : (O, 1)     = 0.5 * (b1 + b2)
    """
    hw = hidden_dim_wavelet
    w12_t = jnp.asarray((0.5 * w1).T)
    whad_t = jnp.asarray((0.5 * w2[:hw, :]).T)
    b_fm = (0.5 * (b1 + b2)).reshape(-1, 1)
    return w12_t, whad_t, b_fm


def gate_mechanism_branch(lstm_features, gat_features, w12_t, whad_t, b_fm,
                          *, block_b=2048, in_dtype=None):
    """lstm_features: (B, Hw), gat_features: (B, Hg); params from prepare_gate_params.

    Returns (B, O) float32, matching the PyTorch module's output layout.
    """
    B, Hw = lstm_features.shape
    _, Hg = gat_features.shape
    O, K12 = w12_t.shape
    assert K12 == Hw + Hg, "w12_t must be (O, Hw+Hg)"
    assert whad_t.shape == (O, Hw), "whad_t must be (O, Hw)"
    assert b_fm.shape == (O, 1)
    assert Hg >= Hw, "module assumes gat dim >= lstm dim (non-negative padding)"

    # Single feature-major input stream: [lstm ; gat] stacked on the feature (sublane)
    # axis, batch on lanes.  (Ideally the caller already stores activations this way.)
    x_fm = jnp.concatenate([lstm_features.T, gat_features.T], axis=0)  # (Hw+Hg, B)
    if in_dtype is not None:
        x_fm = x_fm.astype(in_dtype)   # e.g. bf16: halves HBM traffic (biggest win on v5e)

    # Batch tile on the lane axis: full batch when small; otherwise a multiple of 128,
    # sized so the grid has >= 2 steps (v7x megacore) but capped at block_b so per-step
    # overhead stays amortized.  VMEM is never a constraint at these sizes.
    if B <= 128:
        tb = B
    else:
        tb = max(128, min(block_b, _round_up(pl.cdiv(B, 2), 128)))
    num_steps = pl.cdiv(B, tb)

    x_spec_kw = {"pipeline_mode": pl.Buffered(3)} if num_steps >= 3 else {}

    out_fm = pl.pallas_call(
        gate_kernel,
        out_shape=jax.ShapeDtypeStruct((O, B), jnp.float32),
        grid=(num_steps,),
        in_specs=[
            pl.BlockSpec((K12, tb), lambda i: (0, i), **x_spec_kw),  # activations: lane-tiled
            pl.BlockSpec((O, K12), lambda i: (0, 0)),                # weights: resident
            pl.BlockSpec((O, Hw), lambda i: (0, 0)),
            pl.BlockSpec((O, 1), lambda i: (0, 0)),                  # fused bias: resident
        ],
        out_specs=pl.BlockSpec((O, tb), lambda i: (0, i)),           # lane-dense stores
        compiler_params=pltpu.CompilerParams(
            dimension_semantics=("parallel",),   # megacore batch sharding on v7x
        ),
    )(x_fm, w12_t, whad_t, b_fm)

    return out_fm.T  # (B, O) to match the module's output layout


def reference(lstm_features, gat_features, w1, b1, w2, b2):
    B, Hw = lstm_features.shape
    Hg = gat_features.shape[1]
    concat = jnp.concatenate([lstm_features, gat_features], axis=1)
    t1 = concat @ w1 + b1
    lstm_padded = jnp.concatenate(
        [lstm_features, jnp.zeros((B, Hg - Hw), lstm_features.dtype)], axis=1
    )
    t2 = (gat_features * lstm_padded) @ w2 + b2
    return jax.nn.sigmoid((t1 + t2) / 2.0)


if __name__ == "__main__":
    # Shapes consistent with the module: hidden_dim_Wavelet=16, hidden_dim_gat=32,
    # output_dim=32.
    Hw, Hg, O = 16, 32, 32

    key = jax.random.PRNGKey(0)
    _, _, k_w1, k_b1, k_w2, k_b2 = jax.random.split(key, 6)

    # Deterministic parameter init (uniform like nn.Linear's default scale).
    bound1 = 1.0 / jnp.sqrt(Hw + Hg)
    bound2 = 1.0 / jnp.sqrt(Hg)
    w1 = jax.random.uniform(k_w1, (Hw + Hg, O), jnp.float32, -bound1, bound1)
    b1 = jax.random.uniform(k_b1, (O,), jnp.float32, -bound1, bound1)
    w2 = jax.random.uniform(k_w2, (Hg, O), jnp.float32, -bound2, bound2)
    b2 = jax.random.uniform(k_b2, (O,), jnp.float32, -bound2, bound2)

    # One-time param preprocessing (outside the per-call path).
    w12_t, whad_t, b_fm = prepare_gate_params(w1, b1, w2, b2, Hw)
    w12_t, whad_t, b_fm = jax.block_until_ready((w12_t, whad_t, b_fm))

    # B=8: module-like tiny batch (single grid step, lanes == full batch).
    # B=384: exercises lane-tiled path (tb=256, grid=2, partial last block + megacore).
    for B in (8, 384):
        kb = jax.random.fold_in(key, B)
        k_lstm, k_gat = jax.random.split(kb)
        lstm_features = jax.random.normal(k_lstm, (B, Hw), dtype=jnp.float32)
        gat_features = jax.random.normal(k_gat, (B, Hg), dtype=jnp.float32)

        out = gate_mechanism_branch(lstm_features, gat_features, w12_t, whad_t, b_fm)
        out = jax.block_until_ready(out)

        ref = reference(lstm_features, gat_features, w1, b1, w2, b2)
        assert out.shape == (B, O)
        assert jnp.allclose(out, ref, atol=1e-5, rtol=1e-5), f"mismatch at B={B}"

    print("KERNEL_OK")
</pallas_src>

<mosaic_0001>
module attributes {stable_mosaic.version = 11 : i64} {
  func.func @gate_kernel(%arg0: i32, %arg1: memref<48x8xf32, #tpu.memory_space<vmem>>, %arg2: memref<32x48xf32, #tpu.memory_space<vmem>>, %arg3: memref<32x16xf32, #tpu.memory_space<vmem>>, %arg4: memref<32x1xf32, #tpu.memory_space<vmem>>, %arg5: memref<32x8xf32, #tpu.memory_space<vmem>>) attributes {dimension_semantics = [#tpu.dimension_semantics<parallel>], iteration_bounds = array<i64: 1>, scalar_prefetch = 0 : i64, scratch_operands = 0 : i64, tpu.core_type = #tpu.core_type<tc>, window_params = [{transform_indices = @transform_0, window_bounds = array<i64: 48, 8>}, {pipeline_mode = #tpu.pipeline_mode<synchronous>, transform_indices = @transform_1, window_bounds = array<i64: 32, 48>}, {pipeline_mode = #tpu.pipeline_mode<synchronous>, transform_indices = @transform_2, window_bounds = array<i64: 32, 16>}, {pipeline_mode = #tpu.pipeline_mode<synchronous>, transform_indices = @transform_3, window_bounds = array<i64: 32, 1>}, {transform_indices = @transform_4, window_bounds = array<i64: 32, 8>}]} {
    %c0 = arith.constant 0 : index
    %c0_0 = arith.constant 0 : index
    %0 = vector.load %arg1[%c0, %c0_0] : memref<48x8xf32, #tpu.memory_space<vmem>>, vector<48x8xf32>
    %1 = vector.extract_strided_slice %0 {offsets = [0, 0], sizes = [16, 8], strides = [1, 1]} : vector<48x8xf32> to vector<16x8xf32>
    %2 = vector.extract_strided_slice %0 {offsets = [16, 0], sizes = [16, 8], strides = [1, 1]} : vector<48x8xf32> to vector<16x8xf32>
    %3 = arith.mulf %2, %1 : vector<16x8xf32>
    %c0_1 = arith.constant 0 : index
    %c0_2 = arith.constant 0 : index
    %4 = vector.load %arg2[%c0_1, %c0_2] : memref<32x48xf32, #tpu.memory_space<vmem>>, vector<32x48xf32>
    %cst = arith.constant dense<0.000000e+00> : vector<32x8xf32>
    %5 = tpu.matmul %4, %0, %cst {dimension_numbers = #tpu.dot_dimension_numbers<[1], [0], [0], [1], [0, 0, 1, 1], [], []>} : vector<32x48xf32>, vector<48x8xf32>, vector<32x8xf32> -> vector<32x8xf32>
    %c0_3 = arith.constant 0 : index
    %c0_4 = arith.constant 0 : index
    %6 = vector.load %arg3[%c0_3, %c0_4] : memref<32x16xf32, #tpu.memory_space<vmem>>, vector<32x16xf32>
    %cst_5 = arith.constant dense<0.000000e+00> : vector<32x8xf32>
    %7 = tpu.matmul %6, %3, %cst_5 {dimension_numbers = #tpu.dot_dimension_numbers<[1], [0], [0], [1], [0, 0, 1, 1], [], []>} : vector<32x16xf32>, vector<16x8xf32>, vector<32x8xf32> -> vector<32x8xf32>
    %8 = arith.addf %5, %7 : vector<32x8xf32>
    %c0_6 = arith.constant 0 : index
    %c0_7 = arith.constant 0 : index
    %9 = vector.load %arg4[%c0_6, %c0_7] : memref<32x1xf32, #tpu.memory_space<vmem>>, vector<32x1xf32>
    %10 = vector.broadcast %9 : vector<32x1xf32> to vector<32x8xf32>
    %11 = arith.addf %8, %10 : vector<32x8xf32>
    %12 = arith.negf %11 : vector<32x8xf32>
    %13 = math.exp %12 : vector<32x8xf32>
    %cst_8 = arith.constant 1.000000e+00 : f32
    %14 = vector.broadcast %cst_8 : f32 to vector<32x8xf32>
    %15 = arith.addf %14, %13 : vector<32x8xf32>
    %16 = arith.divf %14, %15 : vector<32x8xf32>
    %c0_9 = arith.constant 0 : index
    %c0_10 = arith.constant 0 : index
    %17 = vector.load %arg5[%c0_9, %c0_10] : memref<32x8xf32, #tpu.memory_space<vmem>>, vector<32x8xf32>
    tpu.vector_store %arg5[%c0_9, %c0_10], %16 {strides = array<i32>} : memref<32x8xf32, #tpu.memory_space<vmem>>, vector<32x8xf32>,
    return
  }
  func.func @transform_0(%arg0: i32) -> (i32, i32) {
    %c0_i32 = arith.constant 0 : i32
    %c0_i32_0 = arith.constant 0 : i32
    return %c0_i32, %arg0 : i32, i32
  }
  func.func @transform_1(%arg0: i32) -> (i32, i32) {
    %c0_i32 = arith.constant 0 : i32
    %c0_i32_0 = arith.constant 0 : i32
    %c0_i32_1 = arith.constant 0 : i32
    return %c0_i32, %c0_i32_0 : i32, i32
  }
  func.func @transform_2(%arg0: i32) -> (i32, i32) {
    %c0_i32 = arith.constant 0 : i32
    %c0_i32_0 = arith.constant 0 : i32
    %c0_i32_1 = arith.constant 0 : i32
    return %c0_i32, %c0_i32_0 : i32, i32
  }
  func.func @transform_3(%arg0: i32) -> (i32, i32) {
    %c0_i32 = arith.constant 0 : i32
    %c0_i32_0 = arith.constant 0 : i32
    %c0_i32_1 = arith.constant 0 : i32
    return %c0_i32, %c0_i32_0 : i32, i32
  }
  func.func @transform_4(%arg0: i32) -> (i32, i32) {
    %c0_i32 = arith.constant 0 : i32
    %c0_i32_0 = arith.constant 0 : i32
    return %c0_i32, %arg0 : i32, i32
  }
}

</mosaic_0001>

<llo_original>
// kernel: tpu_custom_call.1
$region0: #{tpu_custom_call.1}
  #allocation0 [shape = 'u32[]', space=smem, size = 0x4, offset = 0x4, fixed_abs, tag = 'smem constant byte address 0x4 - core index']
  #allocation1 [shape = 'u32[72,128]{1,0:T(1,128)}', space=vmem, size = 0x9000, scoped, tag = 'internal scratch']
  %s0 = inlined_call_operand.vmem [shape: f32[48,8], index: 0, kind: input, shape index: {}]
  %s1 = inlined_call_operand.vmem [shape: f32[32,48], index: 1, kind: input, shape index: {}]
  %s2 = inlined_call_operand.vmem [shape: f32[32,16], index: 2, kind: input, shape index: {}]
  %s3 = inlined_call_operand.vmem [shape: f32[32,1], index: 3, kind: input, shape index: {}]
  %s4 = inlined_call_operand.vmem [shape: f32[32,8], index: 4, kind: output, shape index: {}]
  %s5 = sld [smem:[#allocation0]]
  $region26: #{tpu_custom_call.1} parent=0
    _
  %s7 = ssub.s32 1, %s5
  %s8 = scalar_select 0, %s7, %s5
  // Predicated region
  $region2: #{tpu_custom_call.1} parent=0 // pred_check
    _
  $region3: #{tpu_custom_call.1} parent=0 // pred_check_branch
    %10 = sbr.rel (0) target = $region5
  $region4: #{tpu_custom_call.1} parent=0 // pred_region
    _
  $region5: #{tpu_custom_call.1} parent=0 // pred_fallthru
    _
  // Predicated region
  $region6: #{tpu_custom_call.1} parent=0 // pred_check
    _
  $region7: #{tpu_custom_call.1} parent=0 // pred_check_branch
    %12 = sbr.rel (0) target = $region9
  $region8: #{tpu_custom_call.1} parent=0 // pred_region
    _
  $region9: #{tpu_custom_call.1} parent=0 // pred_fallthru
    _
  // Predicated region
  $region10: #{tpu_custom_call.1} parent=0 // pred_check
    _
  $region11: #{tpu_custom_call.1} parent=0 // pred_check_branch
    %14 = sbr.rel (0) target = $region13
  $region12: #{tpu_custom_call.1} parent=0 // pred_region
    _
  $region13: #{tpu_custom_call.1} parent=0 // pred_fallthru
    _
  // Predicated region
  $region14: #{tpu_custom_call.1} parent=0 // pred_check
    _
  $region15: #{tpu_custom_call.1} parent=0 // pred_check_branch
    %16 = sbr.rel (0) target = $region17
  $region16: #{tpu_custom_call.1} parent=0 // pred_region
    _
  $region17: #{tpu_custom_call.1} parent=0 // pred_fallthru
    _
  %v17 = vld [vmem:[%s0] sm:$0xff]
  %v18 = vld [vmem:[%s0 + $0x8] sm:$0xff]
  %v19 = vld [vmem:[%s0 + $0x10] sm:$0xff]
  %v20 = vld [vmem:[%s0 + $0x18] sm:$0xff]
  %v21 = vld [vmem:[%s0 + $0x20] sm:$0xff]
  %v22 = vld [vmem:[%s0 + $0x28] sm:$0xff]
  %v23 = vmul.f32 %v19, %v17
  %v24 = vmul.f32 %v20, %v18
  %v25 = vld [vmem:[%s1] sm:$0xff]
  %v26 = vld [vmem:[%s1 + $0x8] sm:$0xff]
  %v27 = vld [vmem:[%s1 + $0x10] sm:$0xff]
  %v28 = vld [vmem:[%s1 + $0x18] sm:$0xff]
  %v29 = vld [vmem:[%s2] sm:$0xff]
  %v30 = vld [vmem:[%s2 + $0x8] sm:$0xff]
  %v31 = vld [vmem:[%s2 + $0x10] sm:$0xff]
  %v32 = vld [vmem:[%s2 + $0x18] sm:$0xff]
  %vm33 = vcmask 130048
  %v35 = vsel %vm33, %v29, 0
  %v38 = vsel %vm33, %v30, 0
  %v41 = vsel %vm33, %v31, 0
  %v44 = vsel %vm33, %v32, 0
  %46 = vmatpush.msra.mxu0 0.0
  %47 = vmatpush.msra.mxu0 0.0
  %48 = vmatpush.msra.mxu0 0.0
  %49 = vmatpush.msra.mxu0 0.0
  %50 = vmatpush.msra.mxu0 0.0
  %51 = vmatpush.msra.mxu0 0.0
  %52 = vmatpush.msra.mxu0 0.0
  %53 = vmatpush.msra.mxu0 0.0
  %54 = vmatpush.msra.mxu0 0.0
  %55 = vmatpush.msra.mxu0 0.0
  %56 = vmatpush.msra.mxu0 0.0
  %57 = vmatpush.msra.mxu0 0.0
  %58 = vmatpush.msra.mxu0 0.0
  %59 = vmatpush.msra.mxu0 0.0
  %60 = vmatpush.msra.mxu0 %v24
  %61 = vmatpush.msra.mxu0 %v23
  %62 = vmatmul.f32.gmra.mxu0 %v35
  %v63 = vpop.f32.mrf.mxu0
  %v64 = vadd.f32 0.0, %v63
  %65 = vmatmul.f32.gmra.mxu0 %v38
  %v66 = vpop.f32.mrf.mxu0
  %v67 = vadd.f32 0.0, %v66
  %68 = vmatmul.f32.gmra.mxu0 %v41
  %v69 = vpop.f32.mrf.mxu0
  %v70 = vadd.f32 0.0, %v69
  %71 = vmatmul.f32.gmra.mxu0 %v44
  %v72 = vpop.f32.mrf.mxu0
  %v73 = vadd.f32 0.0, %v72
  %74 = vdwg.mxu0
  %vm75 = vcmask 392192
  %v77 = vsel %vm75, %v25, 0
  %v80 = vsel %vm75, %v26, 0
  %v83 = vsel %vm75, %v27, 0
  %v86 = vsel %vm75, %v28, 0
  %88 = vmatpush.msra.mxu0 0.0
  %89 = vmatpush.msra.mxu0 0.0
  %90 = vmatpush.msra.mxu0 0.0
  %91 = vmatpush.msra.mxu0 0.0
  %92 = vmatpush.msra.mxu0 0.0
  %93 = vmatpush.msra.mxu0 0.0
  %94 = vmatpush.msra.mxu0 0.0
  %95 = vmatpush.msra.mxu0 0.0
  %96 = vmatpush.msra.mxu0 0.0
  %97 = vmatpush.msra.mxu0 0.0
  %98 = vmatpush.msra.mxu0 %v22
  %99 = vmatpush.msra.mxu0 %v21
  %100 = vmatpush.msra.mxu0 %v20
  %101 = vmatpush.msra.mxu0 %v19
  %102 = vmatpush.msra.mxu0 %v18
  %103 = vmatpush.msra.mxu0 %v17
  %104 = vmatmul.f32.gmra.mxu0 %v77
  %v105 = vpop.f32.mrf.mxu0
  %v106 = vadd.f32 %v64, %v105
  %107 = vmatmul.f32.gmra.mxu0 %v80
  %v108 = vpop.f32.mrf.mxu0
  %v109 = vadd.f32 %v67, %v108
  %110 = vmatmul.f32.gmra.mxu0 %v83
  %v111 = vpop.f32.mrf.mxu0
  %v112 = vadd.f32 %v70, %v111
  %113 = vmatmul.f32.gmra.mxu0 %v86
  %v114 = vpop.f32.mrf.mxu0
  %v115 = vadd.f32 %v73, %v114
  %116 = vdwg.mxu0
  %v117 = vld [vmem:[%s3] sm:$0xff]
  %v118 = vld [vmem:[%s3 + $0x8] sm:$0xff]
  %v119 = vld [vmem:[%s3 + $0x10] sm:$0xff]
  %v120 = vld [vmem:[%s3 + $0x18] sm:$0xff]
  %122 = vset.pattern.permute.xlu0 0
  %123 = vperm.xlu0 %122, %v117
  %v124 = vpop.permute.xlu0 %123
  %127 = vset.pattern.permute.xlu0 0
  %128 = vperm.xlu0 %127, %v118
  %v129 = vpop.permute.xlu0 %128
  %132 = vset.pattern.permute.xlu0 0
  %133 = vperm.xlu0 %132, %v119
  %v134 = vpop.permute.xlu0 %133
  %137 = vset.pattern.permute.xlu0 0
  %138 = vperm.xlu0 %137, %v120
  %v139 = vpop.permute.xlu0 %138
  %v141 = vadd.f32 %v106, %v124
  %v142 = vadd.f32 %v109, %v129
  %v143 = vadd.f32 %v112, %v134
  %v144 = vadd.f32 %v115, %v139
  %v145 = vxor.u32 %v141, 2147483648
  %v146 = vxor.u32 %v142, 2147483648
  %v147 = vxor.u32 %v143, 2147483648
  %v148 = vxor.u32 %v144, 2147483648
  %v149 = vmul.f32 %v145, 1.442695
  %v150 = vpow.pop %v149
  %v151 = vmul.f32 %v146, 1.442695
  %v152 = vpow.pop %v151
  %v153 = vmul.f32 %v147, 1.442695
  %v154 = vpow.pop %v153
  %v155 = vmul.f32 %v148, 1.442695
  %v156 = vpow.pop %v155
  %v157 = vadd.f32 %v150, 1.0
  %v158 = vadd.f32 %v152, 1.0
  %v159 = vadd.f32 %v154, 1.0
  %v160 = vadd.f32 %v156, 1.0
  %v161 = vrcp.pop %v157
  %v162 = vmul.f32 %v157, %v161
  %v163 = vsub.f32 1.0, %v162
  %v164 = vmul.f32 %v161, %v163
  %v165 = vadd.f32 %v161, %v164
  %vm166 = vweird.f32 %v157
  %vm167 = vweird.f32 %v161
  %vm168 = vmor %vm166, %vm167
  %v169 = vsel %vm168, %v161, %v165
  %v170 = vand.u32 2147483647, %v157
  %vm171 = vcmp.eq.f32.partialorder %v170, 8.507059e+37
  %v172 = vand.u32 %v157, 2147483648
  %v173 = vor.u32 1.1754944e-38, %v172
  %v174 = vsel %vm171, %v173, %v169
  %v175 = vmul.f32 1.0, %v174
  %v176 = vrcp.pop %v158
  %v177 = vmul.f32 %v158, %v176
  %v178 = vsub.f32 1.0, %v177
  %v179 = vmul.f32 %v176, %v178
  %v180 = vadd.f32 %v176, %v179
  %vm181 = vweird.f32 %v158
  %vm182 = vweird.f32 %v176
  %vm183 = vmor %vm181, %vm182
  %v184 = vsel %vm183, %v176, %v180
  %v185 = vand.u32 2147483647, %v158
  %vm186 = vcmp.eq.f32.partialorder %v185, 8.507059e+37
  %v187 = vand.u32 %v158, 2147483648
  %v188 = vor.u32 1.1754944e-38, %v187
  %v189 = vsel %vm186, %v188, %v184
  %v190 = vmul.f32 1.0, %v189
  %v191 = vrcp.pop %v159
  %v192 = vmul.f32 %v159, %v191
  %v193 = vsub.f32 1.0, %v192
  %v194 = vmul.f32 %v191, %v193
  %v195 = vadd.f32 %v191, %v194
  %vm196 = vweird.f32 %v159
  %vm197 = vweird.f32 %v191
  %vm198 = vmor %vm196, %vm197
  %v199 = vsel %vm198, %v191, %v195
  %v200 = vand.u32 2147483647, %v159
  %vm201 = vcmp.eq.f32.partialorder %v200, 8.507059e+37
  %v202 = vand.u32 %v159, 2147483648
  %v203 = vor.u32 1.1754944e-38, %v202
  %v204 = vsel %vm201, %v203, %v199
  %v205 = vmul.f32 1.0, %v204
  %v206 = vrcp.pop %v160
  %v207 = vmul.f32 %v160, %v206
  %v208 = vsub.f32 1.0, %v207
  %v209 = vmul.f32 %v206, %v208
  %v210 = vadd.f32 %v206, %v209
  %vm211 = vweird.f32 %v160
  %vm212 = vweird.f32 %v206
  %vm213 = vmor %vm211, %vm212
  %v214 = vsel %vm213, %v206, %v210
  %v215 = vand.u32 2147483647, %v160
  %vm216 = vcmp.eq.f32.partialorder %v215, 8.507059e+37
  %v217 = vand.u32 %v160, 2147483648
  %v218 = vor.u32 1.1754944e-38, %v217
  %v219 = vsel %vm216, %v218, %v214
  %v220 = vmul.f32 1.0, %v219
  %vm221 = vcmask 64512
  %222 = vst.msk [vmem:[%s4] sm:$0xff] %vm221, %v175
  %223 = vst.msk [vmem:[%s4 + $0x8] sm:$0xff] %vm221, %v190
  %224 = vst.msk [vmem:[%s4 + $0x10] sm:$0xff] %vm221, %v205
  %225 = vst.msk [vmem:[%s4 + $0x18] sm:$0xff] %vm221, %v220
  // Predicated region
  $region18: #{tpu_custom_call.1} parent=0 // pred_check
    _
  $region19: #{tpu_custom_call.1} parent=0 // pred_check_branch
    %227 = sbr.rel (0) target = $region21
  $region20: #{tpu_custom_call.1} parent=0 // pred_region
    _
  $region21: #{tpu_custom_call.1} parent=0 // pred_fallthru
    _
  // Predicated region
  $region22: #{tpu_custom_call.1} parent=0 // pred_check
    _
  $region23: #{tpu_custom_call.1} parent=0 // pred_check_branch
    %229 = sbr.rel (0) target = $region25
  $region24: #{tpu_custom_call.1} parent=0 // pred_region
    _
  $region25: #{tpu_custom_call.1} parent=0 // pred_fallthru
    _

</llo_original>
